<compile_context>
chip_gen: v7x
topology: tpu7x:2x2x1
jax: 0.10.0
libtpu: 0.0.40
codegen_flags: <defaults>
</compile_context>

<pallas_src>
import jax
import jax.numpy as jnp
from jax import lax
from jax.experimental import pallas as pl
from jax.experimental.pallas import tpu as pltpu


def _gelu_exact(x):
    # PyTorch F.gelu default: exact erf-based GELU (kept exact for parity).
    return 0.5 * x * (1.0 + lax.erf(x * 0.7071067811865476))


def _layernorm(x, gamma, beta, eps=1e-5):
    mu = jnp.mean(x, axis=-1, keepdims=True)
    var = jnp.mean((x - mu) ** 2, axis=-1, keepdims=True)
    return (x - mu) * lax.rsqrt(var + eps) * gamma + beta


def mixer_kernel(
    x_ref,                       # (BB*P, H)  f32  -- BB samples flattened into rows
    g1_ref, b1_ref,              # (1, H)  LayerNorm 1
    g2_ref, b2_ref,              # (1, H)  LayerNorm 2
    tw1_ref, tb1_ref,            # (T, P) bf16, (T, 1) f32   token MLP layer 1 (PyTorch layout)
    tw2_ref, tb2_ref,            # (P, T) bf16, (P, 1) f32   token MLP layer 2 (PyTorch layout)
    cw1_ref, cb1_ref,            # (H, C) bf16, (1, C) f32   channel MLP layer 1
    cw2_ref, cb2_ref,            # (C, H) bf16, (1, H) f32   channel MLP layer 2
    o_ref,                       # (BB*P, H)
    tmix_ref,                    # (BB*P, H) f32 scratch: token-mixing branch output
):
    P = tw2_ref.shape[0]
    rows = x_ref.shape[0]
    BB = rows // P               # samples per block (static)

    g1 = g1_ref[...]
    b1 = b1_ref[...]
    tw1 = tw1_ref[...]           # (T, P) bf16
    tb1 = tb1_ref[...]           # (T, 1) f32
    tw2 = tw2_ref[...]           # (P, T) bf16
    tb2 = tb2_ref[...]           # (P, 1) f32

    # ---- token-mixing branch (per sample; block-diagonal across the batch) ----
    # Computed in transposed form to avoid any in-kernel XLU transpose:
    #   h^T = W1 @ LN1(x_s) + b1_col   -> (T, H)
    #   t^T = W2 @ gelu(h^T) + b2_col  -> (P, H)   (== residual addend directly)
    @pl.loop(0, BB, unroll=(BB <= 8))
    def _(s):
        r0 = pl.multiple_of(s * P, P)
        y = _layernorm(x_ref[pl.ds(r0, P), :].astype(jnp.float32), g1, b1)   # (P, H) f32
        h = jnp.dot(tw1, y.astype(tw1.dtype),
                    preferred_element_type=jnp.float32) + tb1                # (T, H) f32
        h = _gelu_exact(h)                                                   # dropout_1: identity (eval)
        t = jnp.dot(tw2, h.astype(tw2.dtype),
                    preferred_element_type=jnp.float32) + tb2                # (P, H) f32
        tmix_ref[pl.ds(r0, P), :] = t                                        # dropout_2: identity (eval)

    # ---- residual + channel-mixing branch (one big matmul over all BB*P rows) ----
    x = x_ref[...].astype(jnp.float32) + tmix_ref[...]                       # (rows, H)
    y2 = _layernorm(x, g2_ref[...], b2_ref[...])                             # (rows, H)
    cw1 = cw1_ref[...]
    cw2 = cw2_ref[...]
    h2 = jnp.dot(y2.astype(cw1.dtype), cw1,
                 preferred_element_type=jnp.float32) + cb1_ref[...]          # (rows, C)
    h2 = _gelu_exact(h2)                                                     # dropout_1: identity (eval)
    c = jnp.dot(h2.astype(cw2.dtype), cw2,
                preferred_element_type=jnp.float32) + cb2_ref[...]           # (rows, H)
    o_ref[...] = (x + c).astype(o_ref.dtype)                                 # dropout_2: identity (eval)


def _pick_block_batch(B, P, target_rows=512):
    """Largest divisor of B giving (BB*P) rows <= target, sublane-aligned,
    preferring >= 2 grid steps so both v7x TensorCores get work."""
    cands = [bb for bb in range(1, B + 1)
             if B % bb == 0
             and ((bb * P) % 8 == 0 or bb == B)
             and bb * P <= target_rows]
    if not cands:
        return B
    multi = [bb for bb in cands if B // bb >= 2]
    return max(multi) if multi else max(cands)


def mixer_layer(x, params, *, block_batch=None):
    """x: (B, P, H) float32.  params: dict of weights in kernel layout (f32)."""
    B, P, H = x.shape
    BB = _pick_block_batch(B, P) if block_batch is None else block_batch
    assert B % BB == 0
    rows = BB * P

    # Present the kernel a lane/sublane-dense 2D view: samples stacked along rows.
    x2d = x.reshape(B * P, H)

    # Matmul weights go to the MXU in bf16 (accumulation stays f32 in-kernel).
    bf16 = jnp.bfloat16
    tw1 = params["tw1"].astype(bf16)
    tw2 = params["tw2"].astype(bf16)
    cw1 = params["cw1"].astype(bf16)
    cw2 = params["cw2"].astype(bf16)

    def rep(a):  # full-array block, constant index map (weight resident per step)
        return pl.BlockSpec(a.shape, lambda i: (0, 0))

    in_specs = [
        pl.BlockSpec((rows, H), lambda i: (i, 0)),     # x slab: BB samples
        rep(params["g1"]), rep(params["b1"]),          # LayerNorm 1
        rep(params["g2"]), rep(params["b2"]),          # LayerNorm 2
        rep(tw1), rep(params["tb1"]),                  # token W1 (T,P), b1 (T,1)
        rep(tw2), rep(params["tb2"]),                  # token W2 (P,T), b2 (P,1)
        rep(cw1), rep(params["cb1"]),                  # channel W1 (H,C), b1 (1,C)
        rep(cw2), rep(params["cb2"]),                  # channel W2 (C,H), b2 (1,H)
    ]

    out2d = pl.pallas_call(
        mixer_kernel,
        out_shape=jax.ShapeDtypeStruct((B * P, H), x.dtype),
        grid_spec=pltpu.PrefetchScalarGridSpec(
            num_scalar_prefetch=0,
            grid=(B // BB,),
            in_specs=in_specs,
            out_specs=pl.BlockSpec((rows, H), lambda i: (i, 0)),
            scratch_shapes=[pltpu.VMEM((rows, H), jnp.float32)],
        ),
        compiler_params=pltpu.CompilerParams(
            dimension_semantics=("parallel",),
            vmem_limit_bytes=64 * 1024 * 1024,
        ),
    )(
        x2d,
        params["g1"], params["b1"], params["g2"], params["b2"],
        tw1, params["tb1"], tw2, params["tb2"],
        cw1, params["cb1"], cw2, params["cb2"],
    )
    return out2d.reshape(B, P, H)


def reference_mixer(x, params):
    """Pure-JAX f32 reference mirroring the PyTorch forward (eval mode)."""
    y = _layernorm(x, params["g1"], params["b1"])
    yt = jnp.transpose(y, (0, 2, 1))                              # (B, H, P)
    h = _gelu_exact(yt @ params["tw1"].T + params["tb1"][:, 0])   # (B, H, T)
    t = h @ params["tw2"].T + params["tb2"][:, 0]                 # (B, H, P)
    x = x + jnp.transpose(t, (0, 2, 1))
    y2 = _layernorm(x, params["g2"], params["b2"])
    h2 = _gelu_exact(y2 @ params["cw1"] + params["cb1"][0])
    c = h2 @ params["cw2"] + params["cb2"][0]
    return x + c


def make_params(key, n_patches, hidden_dim, token_mlp_dim, channel_mlp_dim):
    ks = jax.random.split(key, 8)
    scale = 0.05
    return {
        "g1": jnp.ones((1, hidden_dim), jnp.float32),
        "b1": jnp.zeros((1, hidden_dim), jnp.float32) + 0.01,
        "g2": jnp.ones((1, hidden_dim), jnp.float32) * 1.1,
        "b2": jnp.zeros((1, hidden_dim), jnp.float32) - 0.02,
        # Token MLP in PyTorch nn.Linear (out, in) layout -> no in-kernel transposes.
        "tw1": scale * jax.random.normal(ks[0], (token_mlp_dim, n_patches), jnp.float32),
        "tb1": scale * jax.random.normal(ks[1], (token_mlp_dim, 1), jnp.float32),
        "tw2": scale * jax.random.normal(ks[2], (n_patches, token_mlp_dim), jnp.float32),
        "tb2": scale * jax.random.normal(ks[3], (n_patches, 1), jnp.float32),
        # Channel MLP pre-transposed to (in, out).
        "cw1": scale * jax.random.normal(ks[4], (hidden_dim, channel_mlp_dim), jnp.float32),
        "cb1": scale * jax.random.normal(ks[5], (1, channel_mlp_dim), jnp.float32),
        "cw2": scale * jax.random.normal(ks[6], (channel_mlp_dim, hidden_dim), jnp.float32),
        "cb2": scale * jax.random.normal(ks[7], (1, hidden_dim), jnp.float32),
    }


if __name__ == "__main__":
    B, P, H = 2, 8, 32            # batch, n_patches, hidden_dim
    T, C = 16, 64                 # token_mlp_dim, channel_mlp_dim

    key = jax.random.PRNGKey(0)
    kx, kp = jax.random.split(key)
    x = jax.random.normal(kx, (B, P, H), jnp.float32)
    params = make_params(kp, P, H, T, C)

    out = mixer_layer(x, params)
    out = jax.block_until_ready(out)

    ref = reference_mixer(x, params)
    assert out.shape == (B, P, H)
    max_err = float(jnp.max(jnp.abs(out - ref)))
    # Tolerance loosened vs the pure-f32 version because matmul operands/weights
    # are bf16 (f32 accumulation); see perf review.
    assert jnp.allclose(out, ref, atol=5e-2, rtol=5e-2), f"mismatch vs reference (max abs err {max_err})"

    print("KERNEL_OK")
</pallas_src>

<mosaic_0001>
module attributes {stable_mosaic.version = 11 : i64} {
  func.func @mixer_kernel(%arg0: i32, %arg1: memref<8x32xf32, #tpu.memory_space<vmem>>, %arg2: memref<1x32xf32, #tpu.memory_space<vmem>>, %arg3: memref<1x32xf32, #tpu.memory_space<vmem>>, %arg4: memref<1x32xf32, #tpu.memory_space<vmem>>, %arg5: memref<1x32xf32, #tpu.memory_space<vmem>>, %arg6: memref<16x8xbf16, #tpu.memory_space<vmem>>, %arg7: memref<16x1xf32, #tpu.memory_space<vmem>>, %arg8: memref<8x16xbf16, #tpu.memory_space<vmem>>, %arg9: memref<8x1xf32, #tpu.memory_space<vmem>>, %arg10: memref<32x64xbf16, #tpu.memory_space<vmem>>, %arg11: memref<1x64xf32, #tpu.memory_space<vmem>>, %arg12: memref<64x32xbf16, #tpu.memory_space<vmem>>, %arg13: memref<1x32xf32, #tpu.memory_space<vmem>>, %arg14: memref<8x32xf32, #tpu.memory_space<vmem>>, %arg15: memref<8x32xf32, #tpu.memory_space<vmem>>) attributes {dimension_semantics = [#tpu.dimension_semantics<parallel>], iteration_bounds = array<i64: 2>, scalar_prefetch = 0 : i64, scratch_operands = 1 : i64, tpu.core_type = #tpu.core_type<tc>, window_params = [{transform_indices = @transform_0, window_bounds = array<i64: 8, 32>}, {pipeline_mode = #tpu.pipeline_mode<synchronous>, transform_indices = @transform_1, window_bounds = array<i64: 1, 32>}, {pipeline_mode = #tpu.pipeline_mode<synchronous>, transform_indices = @transform_2, window_bounds = array<i64: 1, 32>}, {pipeline_mode = #tpu.pipeline_mode<synchronous>, transform_indices = @transform_3, window_bounds = array<i64: 1, 32>}, {pipeline_mode = #tpu.pipeline_mode<synchronous>, transform_indices = @transform_4, window_bounds = array<i64: 1, 32>}, {pipeline_mode = #tpu.pipeline_mode<synchronous>, transform_indices = @transform_5, window_bounds = array<i64: 16, 8>}, {pipeline_mode = #tpu.pipeline_mode<synchronous>, transform_indices = @transform_6, window_bounds = array<i64: 16, 1>}, {pipeline_mode = #tpu.pipeline_mode<synchronous>, transform_indices = @transform_7, window_bounds = array<i64: 8, 16>}, {pipeline_mode = #tpu.pipeline_mode<synchronous>, transform_indices = @transform_8, window_bounds = array<i64: 8, 1>}, {pipeline_mode = #tpu.pipeline_mode<synchronous>, transform_indices = @transform_9, window_bounds = array<i64: 32, 64>}, {pipeline_mode = #tpu.pipeline_mode<synchronous>, transform_indices = @transform_10, window_bounds = array<i64: 1, 64>}, {pipeline_mode = #tpu.pipeline_mode<synchronous>, transform_indices = @transform_11, window_bounds = array<i64: 64, 32>}, {pipeline_mode = #tpu.pipeline_mode<synchronous>, transform_indices = @transform_12, window_bounds = array<i64: 1, 32>}, {transform_indices = @transform_13, window_bounds = array<i64: 8, 32>}]} {
    %c0 = arith.constant 0 : index
    %c0_0 = arith.constant 0 : index
    %0 = vector.load %arg2[%c0, %c0_0] : memref<1x32xf32, #tpu.memory_space<vmem>>, vector<1x32xf32>
    %c0_1 = arith.constant 0 : index
    %c0_2 = arith.constant 0 : index
    %1 = vector.load %arg3[%c0_1, %c0_2] : memref<1x32xf32, #tpu.memory_space<vmem>>, vector<1x32xf32>
    %c0_3 = arith.constant 0 : index
    %c0_4 = arith.constant 0 : index
    %2 = vector.load %arg6[%c0_3, %c0_4] : memref<16x8xbf16, #tpu.memory_space<vmem>>, vector<16x8xbf16>
    %c0_5 = arith.constant 0 : index
    %c0_6 = arith.constant 0 : index
    %3 = vector.load %arg7[%c0_5, %c0_6] : memref<16x1xf32, #tpu.memory_space<vmem>>, vector<16x1xf32>
    %c0_7 = arith.constant 0 : index
    %c0_8 = arith.constant 0 : index
    %4 = vector.load %arg8[%c0_7, %c0_8] : memref<8x16xbf16, #tpu.memory_space<vmem>>, vector<8x16xbf16>
    %c0_9 = arith.constant 0 : index
    %c0_10 = arith.constant 0 : index
    %5 = vector.load %arg9[%c0_9, %c0_10] : memref<8x1xf32, #tpu.memory_space<vmem>>, vector<8x1xf32>
    %c0_i32 = arith.constant 0 : i32
    %c1_i32 = arith.constant 1 : i32
    %6 = arith.muli %c0_i32, %c1_i32 : i32
    %c0_i32_11 = arith.constant 0 : i32
    %7 = arith.addi %c0_i32_11, %6 : i32
    %c8_i32 = arith.constant 8 : i32
    %8 = arith.muli %7, %c8_i32 : i32
    %9 = tpu.assume_multiple %8, 8 : i32
    %10 = arith.index_cast %9 : i32 to index
    %c0_12 = arith.constant 0 : index
    %11 = vector.load %arg1[%10, %c0_12] : memref<8x32xf32, #tpu.memory_space<vmem>>, vector<8x32xf32>
    %cst = arith.constant dense<0.000000e+00> : vector<8xf32>
    %12 = vector.multi_reduction <add>, %11, %cst [1] : vector<8x32xf32> to vector<8xf32>
    %13 = vector.shape_cast %12 : vector<8xf32> to vector<8x1xf32>
    %cst_13 = arith.constant 3.200000e+01 : f32
    %14 = vector.broadcast %cst_13 : f32 to vector<8x1xf32>
    %15 = arith.divf %13, %14 : vector<8x1xf32>
    %16 = vector.broadcast %15 : vector<8x1xf32> to vector<8x32xf32>
    %17 = arith.subf %11, %16 : vector<8x32xf32>
    %18 = arith.mulf %17, %17 : vector<8x32xf32>
    %cst_14 = arith.constant dense<0.000000e+00> : vector<8xf32>
    %19 = vector.multi_reduction <add>, %18, %cst_14 [1] : vector<8x32xf32> to vector<8xf32>
    %20 = vector.shape_cast %19 : vector<8xf32> to vector<8x1xf32>
    %cst_15 = arith.constant 3.200000e+01 : f32
    %21 = vector.broadcast %cst_15 : f32 to vector<8x1xf32>
    %22 = arith.divf %20, %21 : vector<8x1xf32>
    %23 = vector.broadcast %15 : vector<8x1xf32> to vector<8x32xf32>
    %24 = arith.subf %11, %23 : vector<8x32xf32>
    %cst_16 = arith.constant 9.99999974E-6 : f32
    %25 = vector.broadcast %cst_16 : f32 to vector<8x1xf32>
    %26 = arith.addf %22, %25 : vector<8x1xf32>
    %27 = math.rsqrt %26 : vector<8x1xf32>
    %28 = vector.broadcast %27 : vector<8x1xf32> to vector<8x32xf32>
    %29 = arith.mulf %24, %28 : vector<8x32xf32>
    %30 = vector.broadcast %0 : vector<1x32xf32> to vector<8x32xf32>
    %31 = arith.mulf %29, %30 : vector<8x32xf32>
    %32 = vector.broadcast %1 : vector<1x32xf32> to vector<8x32xf32>
    %33 = arith.addf %31, %32 : vector<8x32xf32>
    %34 = arith.truncf %33 : vector<8x32xf32> to vector<8x32xbf16>
    %cst_17 = arith.constant dense<0.000000e+00> : vector<16x32xf32>
    %35 = tpu.matmul %2, %34, %cst_17 {dimension_numbers = #tpu.dot_dimension_numbers<[1], [0], [0], [1], [0, 0, 1, 1], [], []>} : vector<16x8xbf16>, vector<8x32xbf16>, vector<16x32xf32> -> vector<16x32xf32>
    %36 = vector.broadcast %3 : vector<16x1xf32> to vector<16x32xf32>
    %37 = arith.addf %35, %36 : vector<16x32xf32>
    %cst_18 = arith.constant 5.000000e-01 : f32
    %38 = vector.broadcast %cst_18 : f32 to vector<16x32xf32>
    %39 = arith.mulf %38, %37 : vector<16x32xf32>
    %cst_19 = arith.constant 0.707106769 : f32
    %40 = vector.broadcast %cst_19 : f32 to vector<16x32xf32>
    %41 = arith.mulf %37, %40 : vector<16x32xf32>
    %42 = math.erf %41 : vector<16x32xf32>
    %cst_20 = arith.constant 1.000000e+00 : f32
    %43 = vector.broadcast %cst_20 : f32 to vector<16x32xf32>
    %44 = arith.addf %43, %42 : vector<16x32xf32>
    %45 = arith.mulf %39, %44 : vector<16x32xf32>
    %46 = arith.truncf %45 : vector<16x32xf32> to vector<16x32xbf16>
    %cst_21 = arith.constant dense<0.000000e+00> : vector<8x32xf32>
    %47 = tpu.matmul %4, %46, %cst_21 {dimension_numbers = #tpu.dot_dimension_numbers<[1], [0], [0], [1], [0, 0, 1, 1], [], []>} : vector<8x16xbf16>, vector<16x32xbf16>, vector<8x32xf32> -> vector<8x32xf32>
    %48 = vector.broadcast %5 : vector<8x1xf32> to vector<8x32xf32>
    %49 = arith.addf %47, %48 : vector<8x32xf32>
    %50 = arith.index_cast %9 : i32 to index
    %c0_22 = arith.constant 0 : index
    %51 = vector.load %arg15[%50, %c0_22] : memref<8x32xf32, #tpu.memory_space<vmem>>, vector<8x32xf32>
    tpu.vector_store %arg15[%50, %c0_22], %49 {strides = array<i32>} : memref<8x32xf32, #tpu.memory_space<vmem>>, vector<8x32xf32>,
    %c1_i32_23 = arith.constant 1 : i32
    %c0_24 = arith.constant 0 : index
    %c0_25 = arith.constant 0 : index
    %52 = vector.load %arg1[%c0_24, %c0_25] : memref<8x32xf32, #tpu.memory_space<vmem>>, vector<8x32xf32>
    %c0_26 = arith.constant 0 : index
    %c0_27 = arith.constant 0 : index
    %53 = vector.load %arg15[%c0_26, %c0_27] : memref<8x32xf32, #tpu.memory_space<vmem>>, vector<8x32xf32>
    %54 = arith.addf %52, %53 : vector<8x32xf32>
    %c0_28 = arith.constant 0 : index
    %c0_29 = arith.constant 0 : index
    %55 = vector.load %arg4[%c0_28, %c0_29] : memref<1x32xf32, #tpu.memory_space<vmem>>, vector<1x32xf32>
    %c0_30 = arith.constant 0 : index
    %c0_31 = arith.constant 0 : index
    %56 = vector.load %arg5[%c0_30, %c0_31] : memref<1x32xf32, #tpu.memory_space<vmem>>, vector<1x32xf32>
    %cst_32 = arith.constant dense<0.000000e+00> : vector<8xf32>
    %57 = vector.multi_reduction <add>, %54, %cst_32 [1] : vector<8x32xf32> to vector<8xf32>
    %58 = vector.shape_cast %57 : vector<8xf32> to vector<8x1xf32>
    %cst_33 = arith.constant 3.200000e+01 : f32
    %59 = vector.broadcast %cst_33 : f32 to vector<8x1xf32>
    %60 = arith.divf %58, %59 : vector<8x1xf32>
    %61 = vector.broadcast %60 : vector<8x1xf32> to vector<8x32xf32>
    %62 = arith.subf %54, %61 : vector<8x32xf32>
    %63 = arith.mulf %62, %62 : vector<8x32xf32>
    %cst_34 = arith.constant dense<0.000000e+00> : vector<8xf32>
    %64 = vector.multi_reduction <add>, %63, %cst_34 [1] : vector<8x32xf32> to vector<8xf32>
    %65 = vector.shape_cast %64 : vector<8xf32> to vector<8x1xf32>
    %cst_35 = arith.constant 3.200000e+01 : f32
    %66 = vector.broadcast %cst_35 : f32 to vector<8x1xf32>
    %67 = arith.divf %65, %66 : vector<8x1xf32>
    %68 = vector.broadcast %60 : vector<8x1xf32> to vector<8x32xf32>
    %69 = arith.subf %54, %68 : vector<8x32xf32>
    %cst_36 = arith.constant 9.99999974E-6 : f32
    %70 = vector.broadcast %cst_36 : f32 to vector<8x1xf32>
    %71 = arith.addf %67, %70 : vector<8x1xf32>
    %72 = math.rsqrt %71 : vector<8x1xf32>
    %73 = vector.broadcast %72 : vector<8x1xf32> to vector<8x32xf32>
    %74 = arith.mulf %69, %73 : vector<8x32xf32>
    %75 = vector.broadcast %55 : vector<1x32xf32> to vector<8x32xf32>
    %76 = arith.mulf %74, %75 : vector<8x32xf32>
    %77 = vector.broadcast %56 : vector<1x32xf32> to vector<8x32xf32>
    %78 = arith.addf %76, %77 : vector<8x32xf32>
    %c0_37 = arith.constant 0 : index
    %c0_38 = arith.constant 0 : index
    %79 = vector.load %arg10[%c0_37, %c0_38] : memref<32x64xbf16, #tpu.memory_space<vmem>>, vector<32x64xbf16>
    %c0_39 = arith.constant 0 : index
    %c0_40 = arith.constant 0 : index
    %80 = vector.load %arg12[%c0_39, %c0_40] : memref<64x32xbf16, #tpu.memory_space<vmem>>, vector<64x32xbf16>
    %81 = arith.truncf %78 : vector<8x32xf32> to vector<8x32xbf16>
    %cst_41 = arith.constant dense<0.000000e+00> : vector<8x64xf32>
    %82 = tpu.matmul %81, %79, %cst_41 {dimension_numbers = #tpu.dot_dimension_numbers<[1], [0], [0], [1], [0, 0, 1, 1], [], []>} : vector<8x32xbf16>, vector<32x64xbf16>, vector<8x64xf32> -> vector<8x64xf32>
    %c0_42 = arith.constant 0 : index
    %c0_43 = arith.constant 0 : index
    %83 = vector.load %arg11[%c0_42, %c0_43] : memref<1x64xf32, #tpu.memory_space<vmem>>, vector<1x64xf32>
    %84 = vector.broadcast %83 : vector<1x64xf32> to vector<8x64xf32>
    %85 = arith.addf %82, %84 : vector<8x64xf32>
    %cst_44 = arith.constant 5.000000e-01 : f32
    %86 = vector.broadcast %cst_44 : f32 to vector<8x64xf32>
    %87 = arith.mulf %86, %85 : vector<8x64xf32>
    %cst_45 = arith.constant 0.707106769 : f32
    %88 = vector.broadcast %cst_45 : f32 to vector<8x64xf32>
    %89 = arith.mulf %85, %88 : vector<8x64xf32>
    %90 = math.erf %89 : vector<8x64xf32>
    %cst_46 = arith.constant 1.000000e+00 : f32
    %91 = vector.broadcast %cst_46 : f32 to vector<8x64xf32>
    %92 = arith.addf %91, %90 : vector<8x64xf32>
    %93 = arith.mulf %87, %92 : vector<8x64xf32>
    %94 = arith.truncf %93 : vector<8x64xf32> to vector<8x64xbf16>
    %cst_47 = arith.constant dense<0.000000e+00> : vector<8x32xf32>
    %95 = tpu.matmul %94, %80, %cst_47 {dimension_numbers = #tpu.dot_dimension_numbers<[1], [0], [0], [1], [0, 0, 1, 1], [], []>} : vector<8x64xbf16>, vector<64x32xbf16>, vector<8x32xf32> -> vector<8x32xf32>
    %c0_48 = arith.constant 0 : index
    %c0_49 = arith.constant 0 : index
    %96 = vector.load %arg13[%c0_48, %c0_49] : memref<1x32xf32, #tpu.memory_space<vmem>>, vector<1x32xf32>
    %97 = vector.broadcast %96 : vector<1x32xf32> to vector<8x32xf32>
    %98 = arith.addf %95, %97 : vector<8x32xf32>
    %99 = arith.addf %54, %98 : vector<8x32xf32>
    %c0_50 = arith.constant 0 : index
    %c0_51 = arith.constant 0 : index
    %100 = vector.load %arg14[%c0_50, %c0_51] : memref<8x32xf32, #tpu.memory_space<vmem>>, vector<8x32xf32>
    tpu.vector_store %arg14[%c0_50, %c0_51], %99 {strides = array<i32>} : memref<8x32xf32, #tpu.memory_space<vmem>>, vector<8x32xf32>,
    return
  }
  func.func @transform_0(%arg0: i32) -> (i32, i32) {
    %c0_i32 = arith.constant 0 : i32
    %c0_i32_0 = arith.constant 0 : i32
    return %arg0, %c0_i32 : i32, i32
  }
  func.func @transform_1(%arg0: i32) -> (i32, i32) {
    %c0_i32 = arith.constant 0 : i32
    %c0_i32_0 = arith.constant 0 : i32
    %c0_i32_1 = arith.constant 0 : i32
    return %c0_i32, %c0_i32_0 : i32, i32
  }
  func.func @transform_2(%arg0: i32) -> (i32, i32) {
    %c0_i32 = arith.constant 0 : i32
    %c0_i32_0 = arith.constant 0 : i32
    %c0_i32_1 = arith.constant 0 : i32
    return %c0_i32, %c0_i32_0 : i32, i32
  }
  func.func @transform_3(%arg0: i32) -> (i32, i32) {
    %c0_i32 = arith.constant 0 : i32
    %c0_i32_0 = arith.constant 0 : i32
    %c0_i32_1 = arith.constant 0 : i32
    return %c0_i32, %c0_i32_0 : i32, i32
  }
  func.func @transform_4(%arg0: i32) -> (i32, i32) {
    %c0_i32 = arith.constant 0 : i32
    %c0_i32_0 = arith.constant 0 : i32
    %c0_i32_1 = arith.constant 0 : i32
    return %c0_i32, %c0_i32_0 : i32, i32
  }
  func.func @transform_5(%arg0: i32) -> (i32, i32) {
    %c0_i32 = arith.constant 0 : i32
    %c0_i32_0 = arith.constant 0 : i32
    %c0_i32_1 = arith.constant 0 : i32
    return %c0_i32, %c0_i32_0 : i32, i32
  }
  func.func @transform_6(%arg0: i32) -> (i32, i32) {
    %c0_i32 = arith.constant 0 : i32
    %c0_i32_0 = arith.constant 0 : i32
    %c0_i32_1 = arith.constant 0 : i32
    return %c0_i32, %c0_i32_0 : i32, i32
  }
  func.func @transform_7(%arg0: i32) -> (i32, i32) {
    %c0_i32 = arith.constant 0 : i32
    %c0_i32_0 = arith.constant 0 : i32
    %c0_i32_1 = arith.constant 0 : i32
    return %c0_i32, %c0_i32_0 : i32, i32
  }
  func.func @transform_8(%arg0: i32) -> (i32, i32) {
    %c0_i32 = arith.constant 0 : i32
    %c0_i32_0 = arith.constant 0 : i32
    %c0_i32_1 = arith.constant 0 : i32
    return %c0_i32, %c0_i32_0 : i32, i32
  }
  func.func @transform_9(%arg0: i32) -> (i32, i32) {
    %c0_i32 = arith.constant 0 : i32
    %c0_i32_0 = arith.constant 0 : i32
    %c0_i32_1 = arith.constant 0 : i32
    return %c0_i32, %c0_i32_0 : i32, i32
  }
  func.func @transform_10(%arg0: i32) -> (i32, i32) {
    %c0_i32 = arith.constant 0 : i32
    %c0_i32_0 = arith.constant 0 : i32
    %c0_i32_1 = arith.constant 0 : i32
    return %c0_i32, %c0_i32_0 : i32, i32
  }
  func.func @transform_11(%arg0: i32) -> (i32, i32) {
    %c0_i32 = arith.constant 0 : i32
    %c0_i32_0 = arith.constant 0 : i32
    %c0_i32_1 = arith.constant 0 : i32
    return %c0_i32, %c0_i32_0 : i32, i32
  }
  func.func @transform_12(%arg0: i32) -> (i32, i32) {
    %c0_i32 = arith.constant 0 : i32
    %c0_i32_0 = arith.constant 0 : i32
    %c0_i32_1 = arith.constant 0 : i32
    return %c0_i32, %c0_i32_0 : i32, i32
  }
  func.func @transform_13(%arg0: i32) -> (i32, i32) {
    %c0_i32 = arith.constant 0 : i32
    %c0_i32_0 = arith.constant 0 : i32
    return %arg0, %c0_i32 : i32, i32
  }
}

</mosaic_0001>

<llo_original>
// kernel: tpu_custom_call.1
$region0: #{tpu_custom_call.1}
  #allocation0 [shape = 'u32[]', space=smem, size = 0x4, offset = 0x4, fixed_abs, tag = 'smem constant byte address 0x4 - core index']
  #allocation1 [shape = 'u32[144,128]{1,0:T(1,128)}', space=vmem, size = 0x12000, scoped, tag = 'internal scratch']
  #allocation2 [shape = 'f32[8,32]{1,0:T(8,128)}', space=vmem, size = 0x1000, scoped, tag = 'scratch operand']
  %s0 = inlined_call_operand.hbm [shape: f32[16,32], index: 0, kind: input, shape index: {}]
  %s1 = inlined_call_operand.hbm [shape: f32[1,32], index: 1, kind: input, shape index: {}]
  %s2 = inlined_call_operand.hbm [shape: f32[1,32], index: 2, kind: input, shape index: {}]
  %s3 = inlined_call_operand.hbm [shape: f32[1,32], index: 3, kind: input, shape index: {}]
  %s4 = inlined_call_operand.hbm [shape: f32[1,32], index: 4, kind: input, shape index: {}]
  %s5 = inlined_call_operand.hbm [shape: bf16[16,8], index: 5, kind: input, shape index: {}]
  %s6 = inlined_call_operand.hbm [shape: f32[16,1], index: 6, kind: input, shape index: {}]
  %s7 = inlined_call_operand.hbm [shape: bf16[8,16], index: 7, kind: input, shape index: {}]
  %s8 = inlined_call_operand.hbm [shape: f32[8,1], index: 8, kind: input, shape index: {}]
  %s9 = inlined_call_operand.hbm [shape: bf16[32,64], index: 9, kind: input, shape index: {}]
  %s10 = inlined_call_operand.hbm [shape: f32[1,64], index: 10, kind: input, shape index: {}]
  %s11 = inlined_call_operand.hbm [shape: bf16[64,32], index: 11, kind: input, shape index: {}]
  %s12 = inlined_call_operand.hbm [shape: f32[1,32], index: 12, kind: input, shape index: {}]
  %s13 = inlined_call_operand.hbm [shape: f32[16,32], index: 13, kind: output, shape index: {}]
  %s14 = sld [smem:[#allocation0]]
  $region137: #{tpu_custom_call.1} parent=0
    _
  %s16 = ssub.s32 1, %s14
  %s17 = scalar_select 0, %s16, %s14
  $region1: #{tpu_custom_call.1} parent=0
    #allocation3 [shape = 'u8[8192]{0}', space=vmem, size = 0x2000, scoped, tag = 'input window, operand 0']
    #allocation4 [shape = 's32[2]{0}', space=sflag, size = 0x8, scoped, tag = 'scoped memory for tpu_custom_call.1']
    #allocation5 [shape = 's32[2]{0}', space=sflag, size = 0x8, scoped, tag = 'scoped memory for tpu_custom_call.1']
    #allocation6 [shape = 'u8[512]{0}', space=vmem, size = 0x400, scoped, tag = 'input window, operand 1, single buffered']
    #allocation7 [shape = 's32[1]{0}', space=sflag, size = 0x4, scoped, tag = 'scoped memory for tpu_custom_call.1']
    #allocation8 [shape = 'u8[512]{0}', space=vmem, size = 0x400, scoped, tag = 'input window, operand 2, single buffered']
    #allocation9 [shape = 'u8[512]{0}', space=vmem, size = 0x400, scoped, tag = 'input window, operand 3, single buffered']
    #allocation10 [shape = 's32[1]{0}', space=sflag, size = 0x4, scoped, tag = 'scoped memory for tpu_custom_call.1']
    #allocation11 [shape = 'u8[512]{0}', space=vmem, size = 0x400, scoped, tag = 'input window, operand 4, single buffered']
    #allocation12 [shape = 'u8[4096]{0}', space=vmem, size = 0x1000, scoped, tag = 'input window, operand 5, single buffered']
    #allocation13 [shape = 's32[1]{0}', space=sflag, size = 0x4, scoped, tag = 'scoped memory for tpu_custom_call.1']
    #allocation14 [shape = 'u8[8192]{0}', space=vmem, size = 0x2000, scoped, tag = 'input window, operand 6, single buffered']
    #allocation15 [shape = 'u8[2048]{0}', space=vmem, size = 0x800, scoped, tag = 'input window, operand 7, single buffered']
    #allocation16 [shape = 's32[1]{0}', space=sflag, size = 0x4, scoped, tag = 'scoped memory for tpu_custom_call.1']
    #allocation17 [shape = 'u8[4096]{0}', space=vmem, size = 0x1000, scoped, tag = 'input window, operand 8, single buffered']
    #allocation18 [shape = 'u8[8192]{0}', space=vmem, size = 0x2000, scoped, tag = 'input window, operand 9, single buffered']
    #allocation19 [shape = 's32[1]{0}', space=sflag, size = 0x4, scoped, tag = 'scoped memory for tpu_custom_call.1']
    #allocation20 [shape = 'u8[512]{0}', space=vmem, size = 0x400, scoped, tag = 'input window, operand 10, single buffered']
    #allocation21 [shape = 'u8[16384]{0}', space=vmem, size = 0x4000, scoped, tag = 'input window, operand 11, single buffered']
    #allocation22 [shape = 's32[1]{0}', space=sflag, size = 0x4, scoped, tag = 'scoped memory for tpu_custom_call.1']
    #allocation23 [shape = 'u8[512]{0}', space=vmem, size = 0x400, scoped, tag = 'input window, operand 12, single buffered']
    #allocation24 [shape = 'u8[8192]{0}', space=vmem, size = 0x2000, scoped, tag = 'output window, operand 0']
    %18 = vsyncpa [#allocation4], 0
    %s19 = scalar_lea.sflag [#allocation4], 1
    %20 = vsyncpa %s19, 0
    %21 = vsyncpa [#allocation7], 0
    %22 = vsyncpa [#allocation10], 0
    %23 = vsyncpa [#allocation13], 0
    %24 = vsyncpa [#allocation16], 0
    %25 = vsyncpa [#allocation19], 0
    %26 = vsyncpa [#allocation22], 0
    %27 = vsyncpa [#allocation5], 0
    %s28 = scalar_lea.sflag [#allocation5], 1
    %29 = vsyncpa %s28, 0
    loop: start=0, step=1, limit=4
    $region2: #{tpu_custom_call.1} parent=1 // loop_pre_header
      _
    $region3: #{tpu_custom_call.1} parent=1 // loop_header
      %s31 = sphi 0, %s35
      %p32 = scmp.ge.s32.totalorder %s31, 4
      %s41 = sphi 0, %s43
      %s44 = sphi 0, %s41
      %s45 = sphi 0, %s44
      %s61 = sphi 0, %s45
      %s65 = sphi 0, %s65
      %s67 = sphi 0, %s65
      %s68 = sphi 0, %s67
      %s82 = sphi 0, %s68
      %s86 = sphi 0, %s86
      %s88 = sphi 0, %s86
      %s89 = sphi 0, %s88
      %s103 = sphi 0, %s89
      %s107 = sphi 0, %s107
      %s109 = sphi 0, %s107
      %s110 = sphi 0, %s109
      %s124 = sphi 0, %s110
      %s128 = sphi 0, %s128
      %s130 = sphi 0, %s128
      %s131 = sphi 0, %s130
      %s145 = sphi 0, %s131
      %s149 = sphi 0, %s149
      %s151 = sphi 0, %s149
      %s152 = sphi 0, %s151
      %s166 = sphi 0, %s152
      %s170 = sphi 0, %s170
      %s172 = sphi 0, %s170
      %s173 = sphi 0, %s172
      %s187 = sphi 0, %s173
      %s191 = sphi 0, %s191
      %s193 = sphi 0, %s191
      %s194 = sphi 0, %s193
      %s208 = sphi 0, %s194
      %s212 = sphi 0, %s212
      %s214 = sphi 0, %s212
      %s215 = sphi 0, %s214
      %s229 = sphi 0, %s215
      %s233 = sphi 0, %s233
      %s235 = sphi 0, %s233
      %s236 = sphi 0, %s235
      %s250 = sphi 0, %s236
      %s254 = sphi 0, %s254
      %s256 = sphi 0, %s254
      %s257 = sphi 0, %s256
      %s271 = sphi 0, %s257
      %s275 = sphi 0, %s275
      %s277 = sphi 0, %s275
      %s278 = sphi 0, %s277
      %s292 = sphi 0, %s278
      %s296 = sphi 0, %s296
      %s298 = sphi 0, %s296
      %s299 = sphi 0, %s298
      %s313 = sphi 0, %s299
      %s319 = sphi 0, %s321
      %s322 = sphi 0, %s319
      %s323 = sphi 0, %s322
      %s339 = sphi 0, %s323
    $region4: #{tpu_custom_call.1} parent=1 // loop_header_branch
      %34 = sbr.rel (%p32) target = $region8
    $region5: #{tpu_custom_call.1} parent=1 // loop_body
      %s36 = ssub.s32 %s31, 1
      %s37 = ssub.s32 %s31, 2
      %s38 = sadd.s32 %s31, 1
      %s39 = ssub.s32 %s31, %s38
      %p40 = scmp.eq.s32.totalorder %s39, 0
      %s42 = sadd.s32 %s41, 1
      %s43 = scalar_select %p40, %s41, %s42
      %p46 = pneg %p40
      %p47 = scmp.eq.s32.totalorder %s31, 1
      %p48 = por %p46, %p47
      %p49 = scmp.ne.s32.totalorder %s41, %s44
      %p50 = scmp.eq.s32.totalorder %s31, 0
      %p51 = por %p49, %p50
      %p52 = scmp.ne.s32.totalorder %s41, %s44
      %p53 = scmp.eq.s32.totalorder %s36, 1
      %p54 = por %p52, %p53
      %p55 = scmp.ne.s32.totalorder %s44, %s45
      %p56 = scmp.eq.s32.totalorder %s36, 0
      %p57 = por %p55, %p56
      %p58 = scmp.ne.s32.totalorder %s44, %s45
      %p59 = scmp.eq.s32.totalorder %s37, 1
      %p60 = por %p58, %p59
      %p62 = scmp.ne.s32.totalorder %s45, %s61
      %p63 = scmp.eq.s32.totalorder %s37, 0
      %p64 = por %p62, %p63
      %s66 = sadd.s32 %s65, 1
      %p69 = scmp.eq.s32.totalorder %s31, 1
      %p70 = scmp.ne.s32.totalorder %s65, %s67
      %p71 = scmp.eq.s32.totalorder %s31, 0
      %p72 = por %p70, %p71
      %p73 = scmp.ne.s32.totalorder %s65, %s67
      %p74 = scmp.eq.s32.totalorder %s36, 1
      %p75 = por %p73, %p74
      %p76 = scmp.ne.s32.totalorder %s67, %s68
      %p77 = scmp.eq.s32.totalorder %s36, 0
      %p78 = por %p76, %p77
      %p79 = scmp.ne.s32.totalorder %s67, %s68
      %p80 = scmp.eq.s32.totalorder %s37, 1
      %p81 = por %p79, %p80
      %p83 = scmp.ne.s32.totalorder %s68, %s82
      %p84 = scmp.eq.s32.totalorder %s37, 0
      %p85 = por %p83, %p84
      %s87 = sadd.s32 %s86, 1
      %p90 = scmp.eq.s32.totalorder %s31, 1
      %p91 = scmp.ne.s32.totalorder %s86, %s88
      %p92 = scmp.eq.s32.totalorder %s31, 0
      %p93 = por %p91, %p92
      %p94 = scmp.ne.s32.totalorder %s86, %s88
      %p95 = scmp.eq.s32.totalorder %s36, 1
      %p96 = por %p94, %p95
      %p97 = scmp.ne.s32.totalorder %s88, %s89
      %p98 = scmp.eq.s32.totalorder %s36, 0
      %p99 = por %p97, %p98
      %p100 = scmp.ne.s32.totalorder %s88, %s89
      %p101 = scmp.eq.s32.totalorder %s37, 1
      %p102 = por %p100, %p101
      %p104 = scmp.ne.s32.totalorder %s89, %s103
      %p105 = scmp.eq.s32.totalorder %s37, 0
      %p106 = por %p104, %p105
      %s108 = sadd.s32 %s107, 1
      %p111 = scmp.eq.s32.totalorder %s31, 1
      %p112 = scmp.ne.s32.totalorder %s107, %s109
      %p113 = scmp.eq.s32.totalorder %s31, 0
      %p114 = por %p112, %p113
      %p115 = scmp.ne.s32.totalorder %s107, %s109
      %p116 = scmp.eq.s32.totalorder %s36, 1
      %p117 = por %p115, %p116
      %p118 = scmp.ne.s32.totalorder %s109, %s110
      %p119 = scmp.eq.s32.totalorder %s36, 0
      %p120 = por %p118, %p119
      %p121 = scmp.ne.s32.totalorder %s109, %s110
      %p122 = scmp.eq.s32.totalorder %s37, 1
      %p123 = por %p121, %p122
      %p125 = scmp.ne.s32.totalorder %s110, %s124
      %p126 = scmp.eq.s32.totalorder %s37, 0
      %p127 = por %p125, %p126
      %s129 = sadd.s32 %s128, 1
      %p132 = scmp.eq.s32.totalorder %s31, 1
      %p133 = scmp.ne.s32.totalorder %s128, %s130
      %p134 = scmp.eq.s32.totalorder %s31, 0
      %p135 = por %p133, %p134
      %p136 = scmp.ne.s32.totalorder %s128, %s130
      %p137 = scmp.eq.s32.totalorder %s36, 1
      %p138 = por %p136, %p137
      %p139 = scmp.ne.s32.totalorder %s130, %s131
      %p140 = scmp.eq.s32.totalorder %s36, 0
      %p141 = por %p139, %p140
      %p142 = scmp.ne.s32.totalorder %s130, %s131
      %p143 = scmp.eq.s32.totalorder %s37, 1
      %p144 = por %p142, %p143
      %p146 = scmp.ne.s32.totalorder %s131, %s145
      %p147 = scmp.eq.s32.totalorder %s37, 0
      %p148 = por %p146, %p147
      %s150 = sadd.s32 %s149, 1
      %p153 = scmp.eq.s32.totalorder %s31, 1
      %p154 = scmp.ne.s32.totalorder %s149, %s151
      %p155 = scmp.eq.s32.totalorder %s31, 0
      %p156 = por %p154, %p155
      %p157 = scmp.ne.s32.totalorder %s149, %s151
      %p158 = scmp.eq.s32.totalorder %s36, 1
      %p159 = por %p157, %p158
      %p160 = scmp.ne.s32.totalorder %s151, %s152
      %p161 = scmp.eq.s32.totalorder %s36, 0
      %p162 = por %p160, %p161
      %p163 = scmp.ne.s32.totalorder %s151, %s152
      %p164 = scmp.eq.s32.totalorder %s37, 1
      %p165 = por %p163, %p164
      %p167 = scmp.ne.s32.totalorder %s152, %s166
      %p168 = scmp.eq.s32.totalorder %s37, 0
      %p169 = por %p167, %p168
      %s171 = sadd.s32 %s170, 1
      %p174 = scmp.eq.s32.totalorder %s31, 1
      %p175 = scmp.ne.s32.totalorder %s170, %s172
      %p176 = scmp.eq.s32.totalorder %s31, 0
      %p177 = por %p175, %p176
      %p178 = scmp.ne.s32.totalorder %s170, %s172
      %p179 = scmp.eq.s32.totalorder %s36, 1
      %p180 = por %p178, %p179
      %p181 = scmp.ne.s32.totalorder %s172, %s173
      %p182 = scmp.eq.s32.totalorder %s36, 0
      %p183 = por %p181, %p182
      %p184 = scmp.ne.s32.totalorder %s172, %s173
      %p185 = scmp.eq.s32.totalorder %s37, 1
      %p186 = por %p184, %p185
      %p188 = scmp.ne.s32.totalorder %s173, %s187
      %p189 = scmp.eq.s32.totalorder %s37, 0
      %p190 = por %p188, %p189
      %s192 = sadd.s32 %s191, 1
      %p195 = scmp.eq.s32.totalorder %s31, 1
      %p196 = scmp.ne.s32.totalorder %s191, %s193
      %p197 = scmp.eq.s32.totalorder %s31, 0
      %p198 = por %p196, %p197
      %p199 = scmp.ne.s32.totalorder %s191, %s193
      %p200 = scmp.eq.s32.totalorder %s36, 1
      %p201 = por %p199, %p200
      %p202 = scmp.ne.s32.totalorder %s193, %s194
      %p203 = scmp.eq.s32.totalorder %s36, 0
      %p204 = por %p202, %p203
      %p205 = scmp.ne.s32.totalorder %s193, %s194
      %p206 = scmp.eq.s32.totalorder %s37, 1
      %p207 = por %p205, %p206
      %p209 = scmp.ne.s32.totalorder %s194, %s208
      %p210 = scmp.eq.s32.totalorder %s37, 0
      %p211 = por %p209, %p210
      %s213 = sadd.s32 %s212, 1
      %p216 = scmp.eq.s32.totalorder %s31, 1
      %p217 = scmp.ne.s32.totalorder %s212, %s214
      %p218 = scmp.eq.s32.totalorder %s31, 0
      %p219 = por %p217, %p218
      %p220 = scmp.ne.s32.totalorder %s212, %s214
      %p221 = scmp.eq.s32.totalorder %s36, 1
      %p222 = por %p220, %p221
      %p223 = scmp.ne.s32.totalorder %s214, %s215
      %p224 = scmp.eq.s32.totalorder %s36, 0
      %p225 = por %p223, %p224
      %p226 = scmp.ne.s32.totalorder %s214, %s215
      %p227 = scmp.eq.s32.totalorder %s37, 1
      %p228 = por %p226, %p227
      %p230 = scmp.ne.s32.totalorder %s215, %s229
      %p231 = scmp.eq.s32.totalorder %s37, 0
      %p232 = por %p230, %p231
      %s234 = sadd.s32 %s233, 1
      %p237 = scmp.eq.s32.totalorder %s31, 1
      %p238 = scmp.ne.s32.totalorder %s233, %s235
      %p239 = scmp.eq.s32.totalorder %s31, 0
      %p240 = por %p238, %p239
      %p241 = scmp.ne.s32.totalorder %s233, %s235
      %p242 = scmp.eq.s32.totalorder %s36, 1
      %p243 = por %p241, %p242
      %p244 = scmp.ne.s32.totalorder %s235, %s236
      %p245 = scmp.eq.s32.totalorder %s36, 0
      %p246 = por %p244, %p245
      %p247 = scmp.ne.s32.totalorder %s235, %s236
      %p248 = scmp.eq.s32.totalorder %s37, 1
      %p249 = por %p247, %p248
      %p251 = scmp.ne.s32.totalorder %s236, %s250
      %p252 = scmp.eq.s32.totalorder %s37, 0
      %p253 = por %p251, %p252
      %s255 = sadd.s32 %s254, 1
      %p258 = scmp.eq.s32.totalorder %s31, 1
      %p259 = scmp.ne.s32.totalorder %s254, %s256
      %p260 = scmp.eq.s32.totalorder %s31, 0
      %p261 = por %p259, %p260
      %p262 = scmp.ne.s32.totalorder %s254, %s256
      %p263 = scmp.eq.s32.totalorder %s36, 1
      %p264 = por %p262, %p263
      %p265 = scmp.ne.s32.totalorder %s256, %s257
      %p266 = scmp.eq.s32.totalorder %s36, 0
      %p267 = por %p265, %p266
      %p268 = scmp.ne.s32.totalorder %s256, %s257
      %p269 = scmp.eq.s32.totalorder %s37, 1
      %p270 = por %p268, %p269
      %p272 = scmp.ne.s32.totalorder %s257, %s271
      %p273 = scmp.eq.s32.totalorder %s37, 0
      %p274 = por %p272, %p273
      %s276 = sadd.s32 %s275, 1
      %p279 = scmp.eq.s32.totalorder %s31, 1
      %p280 = scmp.ne.s32.totalorder %s275, %s277
      %p281 = scmp.eq.s32.totalorder %s31, 0
      %p282 = por %p280, %p281
      %p283 = scmp.ne.s32.totalorder %s275, %s277
      %p284 = scmp.eq.s32.totalorder %s36, 1
      %p285 = por %p283, %p284
      %p286 = scmp.ne.s32.totalorder %s277, %s278
      %p287 = scmp.eq.s32.totalorder %s36, 0
      %p288 = por %p286, %p287
      %p289 = scmp.ne.s32.totalorder %s277, %s278
      %p290 = scmp.eq.s32.totalorder %s37, 1
      %p291 = por %p289, %p290
      %p293 = scmp.ne.s32.totalorder %s278, %s292
      %p294 = scmp.eq.s32.totalorder %s37, 0
      %p295 = por %p293, %p294
      %s297 = sadd.s32 %s296, 1
      %p300 = scmp.eq.s32.totalorder %s31, 1
      %p301 = scmp.ne.s32.totalorder %s296, %s298
      %p302 = scmp.eq.s32.totalorder %s31, 0
      %p303 = por %p301, %p302
      %p304 = scmp.ne.s32.totalorder %s296, %s298
      %p305 = scmp.eq.s32.totalorder %s36, 1
      %p306 = por %p304, %p305
      %p307 = scmp.ne.s32.totalorder %s298, %s299
      %p308 = scmp.eq.s32.totalorder %s36, 0
      %p309 = por %p307, %p308
      %p310 = scmp.ne.s32.totalorder %s298, %s299
      %p311 = scmp.eq.s32.totalorder %s37, 1
      %p312 = por %p310, %p311
      %p314 = scmp.ne.s32.totalorder %s299, %s313
      %p315 = scmp.eq.s32.totalorder %s37, 0
      %p316 = por %p314, %p315
      %s317 = ssub.s32 %s31, %s38
      %p318 = scmp.eq.s32.totalorder %s317, 0
      %s320 = sadd.s32 %s319, 1
      %s321 = scalar_select %p318, %s319, %s320
      %p324 = pneg %p318
      %p325 = scmp.eq.s32.totalorder %s31, 1
      %p326 = por %p324, %p325
      %p327 = scmp.ne.s32.totalorder %s319, %s322
      %p328 = scmp.eq.s32.totalorder %s31, 0
      %p329 = por %p327, %p328
      %p330 = scmp.ne.s32.totalorder %s319, %s322
      %p331 = scmp.eq.s32.totalorder %s36, 1
      %p332 = por %p330, %p331
      %p333 = scmp.ne.s32.totalorder %s322, %s323
      %p334 = scmp.eq.s32.totalorder %s36, 0
      %p335 = por %p333, %p334
      %p336 = scmp.ne.s32.totalorder %s322, %s323
      %p337 = scmp.eq.s32.totalorder %s37, 1
      %p338 = por %p336, %p337
      %p340 = scmp.ne.s32.totalorder %s323, %s339
      %p341 = scmp.eq.s32.totalorder %s37, 0
      %p342 = por %p340, %p341
      %p343 = scmp.le.s32.totalorder 1, %s31
      %p344 = scmp.lt.s32.totalorder %s31, 3
      %p345 = pnand %p343, %p344
      %p346 = pneg %p345
      // Predicated region
      $region9: #{tpu_custom_call.1} parent=5 // pred_check
        _
      $region10: #{tpu_custom_call.1} parent=5 // pred_check_branch
        %348 = sbr.rel (%p345) target = $region12
      $region11: #{tpu_custom_call.1} parent=5 // pred_region
        %s349 = ssub.s32 %s31, 1
        // Predicated region
        $region13: #{tpu_custom_call.1} parent=11 // pred_check
          %p350 = pneg %p78
        $region14: #{tpu_custom_call.1} parent=11 // pred_check_branch
          %352 = sbr.rel (%p350) target = $region16
        $region15: #{tpu_custom_call.1} parent=11 // pred_region
          %s354 = ssub.s32 16, 16
          %355 = vsyncadd [#allocation7], %s354
          %s357 = sshll.u32 [#allocation6], 4
          %s358 = int_to_ptr.vmem [resolvable:$true] %s357
          %360 = dma.hbm_to_vmem [thread:$0]  %s1, 16, %s358, [#allocation7]
        $region16: #{tpu_custom_call.1} parent=11 // pred_fallthru
          _
        // Predicated region
        $region17: #{tpu_custom_call.1} parent=11 // pred_check
          %p361 = pneg %p99
        $region18: #{tpu_custom_call.1} parent=11 // pred_check_branch
          %363 = sbr.rel (%p361) target = $region20
        $region19: #{tpu_custom_call.1} parent=11 // pred_region
          %s365 = ssub.s32 16, 16
          %366 = vsyncadd [#allocation7], %s365
          %s368 = sshll.u32 [#allocation8], 4
          %s369 = int_to_ptr.vmem [resolvable:$true] %s368
          %371 = dma.hbm_to_vmem [thread:$0]  %s2, 16, %s369, [#allocation7]
        $region20: #{tpu_custom_call.1} parent=11 // pred_fallthru
          _
        // Predicated region
        $region21: #{tpu_custom_call.1} parent=11 // pred_check
          %p372 = pneg %p120
        $region22: #{tpu_custom_call.1} parent=11 // pred_check_branch
          %374 = sbr.rel (%p372) target = $region24
        $region23: #{tpu_custom_call.1} parent=11 // pred_region
          %s376 = ssub.s32 16, 16
          %377 = vsyncadd [#allocation10], %s376
          %s379 = sshll.u32 [#allocation9], 4
          %s380 = int_to_ptr.vmem [resolvable:$true] %s379
          %382 = dma.hbm_to_vmem [thread:$0]  %s3, 16, %s380, [#allocation10]
        $region24: #{tpu_custom_call.1} parent=11 // pred_fallthru
          _
        // Predicated region
        $region25: #{tpu_custom_call.1} parent=11 // pred_check
          %p383 = pneg %p141
        $region26: #{tpu_custom_call.1} parent=11 // pred_check_branch
          %385 = sbr.rel (%p383) target = $region28
        $region27: #{tpu_custom_call.1} parent=11 // pred_region
          %s387 = ssub.s32 16, 16
          %388 = vsyncadd [#allocation10], %s387
          %s390 = sshll.u32 [#allocation11], 4
          %s391 = int_to_ptr.vmem [resolvable:$true] %s390
          %393 = dma.hbm_to_vmem [thread:$0]  %s4, 16, %s391, [#allocation10]
        $region28: #{tpu_custom_call.1} parent=11 // pred_fallthru
          _
        // Predicated region
        $region29: #{tpu_custom_call.1} parent=11 // pred_check
          %p394 = pneg %p162
        $region30: #{tpu_custom_call.1} parent=11 // pred_check_branch
          %396 = sbr.rel (%p394) target = $region32
        $region31: #{tpu_custom_call.1} parent=11 // pred_region
          %s398 = ssub.s32 128, 128
          %399 = vsyncadd [#allocation13], %s398
          %s400 = sshll.u32 [#allocation12], 4
          %s401 = int_to_ptr.vmem [resolvable:$true] %s400
          %406 = dma.hbm_to_vmem [thread:$0]  %s5, 128, %s401, [#allocation13], 64, 64, 4
        $region32: #{tpu_custom_call.1} parent=11 // pred_fallthru
          _
        // Predicated region
        $region33: #{tpu_custom_call.1} parent=11 // pred_check
          %p407 = pneg %p183
        $region34: #{tpu_custom_call.1} parent=11 // pred_check_branch
          %409 = sbr.rel (%p407) target = $region36
        $region35: #{tpu_custom_call.1} parent=11 // pred_region
          %s411 = ssub.s32 256, 256
          %412 = vsyncadd [#allocation13], %s411
          %s413 = sshll.u32 [#allocation14], 4
          %s414 = int_to_ptr.vmem [resolvable:$true] %s413
          %419 = dma.hbm_to_vmem [thread:$0]  %s6, 256, %s414, [#allocation13], 128, 128, 8
        $region36: #{tpu_custom_call.1} parent=11 // pred_fallthru
          _
        // Predicated region
        $region37: #{tpu_custom_call.1} parent=11 // pred_check
          %p420 = pneg %p204
        $region38: #{tpu_custom_call.1} parent=11 // pred_check_branch
          %422 = sbr.rel (%p420) target = $region40
        $region39: #{tpu_custom_call.1} parent=11 // pred_region
          %s424 = ssub.s32 64, 64
          %425 = vsyncadd [#allocation16], %s424
          %s427 = sshll.u32 [#allocation15], 4
          %s428 = int_to_ptr.vmem [resolvable:$true] %s427
          %430 = dma.hbm_to_vmem [thread:$0]  %s7, 64, %s428, [#allocation16]
        $region40: #{tpu_custom_call.1} parent=11 // pred_fallthru
          _
        // Predicated region
        $region41: #{tpu_custom_call.1} parent=11 // pred_check
          %p431 = pneg %p225
        $region42: #{tpu_custom_call.1} parent=11 // pred_check_branch
          %433 = sbr.rel (%p431) target = $region44
        $region43: #{tpu_custom_call.1} parent=11 // pred_region
          %s435 = ssub.s32 128, 128
          %436 = vsyncadd [#allocation16], %s435
          %s438 = sshll.u32 [#allocation17], 4
          %s439 = int_to_ptr.vmem [resolvable:$true] %s438
          %441 = dma.hbm_to_vmem [thread:$0]  %s8, 128, %s439, [#allocation16]
        $region44: #{tpu_custom_call.1} parent=11 // pred_fallthru
          _
        // Predicated region
        $region45: #{tpu_custom_call.1} parent=11 // pred_check
          %p442 = pneg %p246
        $region46: #{tpu_custom_call.1} parent=11 // pred_check_branch
          %444 = sbr.rel (%p442) target = $region48
        $region47: #{tpu_custom_call.1} parent=11 // pred_region
          %s446 = ssub.s32 256, 256
          %447 = vsyncadd [#allocation19], %s446
          %s448 = sshll.u32 [#allocation18], 4
          %s449 = int_to_ptr.vmem [resolvable:$true] %s448
          %454 = dma.hbm_to_vmem [thread:$0]  %s9, 256, %s449, [#allocation19], 64, 64, 4
        $region48: #{tpu_custom_call.1} parent=11 // pred_fallthru
          _
        // Predicated region
        $region49: #{tpu_custom_call.1} parent=11 // pred_check
          %p455 = pneg %p267
        $region50: #{tpu_custom_call.1} parent=11 // pred_check_branch
          %457 = sbr.rel (%p455) target = $region52
        $region51: #{tpu_custom_call.1} parent=11 // pred_region
          %s459 = ssub.s32 16, 16
          %460 = vsyncadd [#allocation19], %s459
          %s462 = sshll.u32 [#allocation20], 4
          %s463 = int_to_ptr.vmem [resolvable:$true] %s462
          %465 = dma.hbm_to_vmem [thread:$0]  %s10, 16, %s463, [#allocation19]
        $region52: #{tpu_custom_call.1} parent=11 // pred_fallthru
          _
        // Predicated region
        $region53: #{tpu_custom_call.1} parent=11 // pred_check
          %p466 = pneg %p288
        $region54: #{tpu_custom_call.1} parent=11 // pred_check_branch
          %468 = sbr.rel (%p466) target = $region56
        $region55: #{tpu_custom_call.1} parent=11 // pred_region
          %s470 = ssub.s32 512, 512
          %471 = vsyncadd [#allocation22], %s470
          %s472 = sshll.u32 [#allocation21], 4
          %s473 = int_to_ptr.vmem [resolvable:$true] %s472
          %478 = dma.hbm_to_vmem [thread:$0]  %s11, 512, %s473, [#allocation22], 64, 64, 4
        $region56: #{tpu_custom_call.1} parent=11 // pred_fallthru
          _
        // Predicated region
        $region57: #{tpu_custom_call.1} parent=11 // pred_check
          %p479 = pneg %p309
        $region58: #{tpu_custom_call.1} parent=11 // pred_check_branch
          %481 = sbr.rel (%p479) target = $region60
        $region59: #{tpu_custom_call.1} parent=11 // pred_region
          %s483 = ssub.s32 16, 16
          %484 = vsyncadd [#allocation22], %s483
          %s486 = sshll.u32 [#allocation23], 4
          %s487 = int_to_ptr.vmem [resolvable:$true] %s486
          %489 = dma.hbm_to_vmem [thread:$0]  %s12, 16, %s487, [#allocation22]
        $region60: #{tpu_custom_call.1} parent=11 // pred_fallthru
          _
      $region12: #{tpu_custom_call.1} parent=5 // pred_fallthru
        _
      %p490 = scmp.lt.s32.totalorder %s31, 2
      // Predicated region
      $region61: #{tpu_custom_call.1} parent=5 // pred_check
        %p491 = pneg %p490
      $region62: #{tpu_custom_call.1} parent=5 // pred_check_branch
        %493 = sbr.rel (%p491) target = $region64
      $region63: #{tpu_custom_call.1} parent=5 // pred_region
        // Predicated region
        $region65: #{tpu_custom_call.1} parent=63 // pred_check
          %p494 = pneg %p51
        $region66: #{tpu_custom_call.1} parent=63 // pred_check_branch
          %496 = sbr.rel (%p494) target = $region68
        $region67: #{tpu_custom_call.1} parent=63 // pred_region
          %s497 = sand.u32 %s41, 1
          %s498 = scalar_lea.sflag [#allocation4], %s497
          %s499 = sand.u32 %s41, 1
          %s500 = smul.addr %s499, 8
          %s501 = scalar_lea.vmem [#allocation3], %s500
          %s503 = ssub.s32 128, 128
          %504 = vsyncadd %s498, %s503
          %s505 = smul.addr %s31, 128
          %s506 = scalar_lea.hbm %s0, %s505
          %s508 = sshll.u32 %s501, 4
          %s509 = int_to_ptr.vmem [resolvable:$true] %s508
          %511 = dma.hbm_to_vmem [thread:$0]  %s506, 128, %s509, %s498
        $region68: #{tpu_custom_call.1} parent=63 // pred_fallthru
          _
      $region64: #{tpu_custom_call.1} parent=5 // pred_fallthru
        _
      %p512 = scmp.le.s32.totalorder 1, %s31
      %p513 = scmp.lt.s32.totalorder %s31, 3
      %p514 = pnand %p512, %p513
      %p515 = pneg %p514
      // Predicated region
      $region69: #{tpu_custom_call.1} parent=5 // pred_check
        _
      $region70: #{tpu_custom_call.1} parent=5 // pred_check_branch
        %517 = sbr.rel (%p514) target = $region72
      $region71: #{tpu_custom_call.1} parent=5 // pred_region
        %s518 = ssub.s32 %s31, 1
        %s519 = sand.u32 %s44, 1
        %s520 = scalar_lea.sflag [#allocation4], %s519
        %s521 = sand.u32 %s44, 1
        %s522 = smul.addr %s521, 8
        %s523 = scalar_lea.vmem [#allocation3], %s522
        // Predicated region
        $region73: #{tpu_custom_call.1} parent=71 // pred_check
          %p524 = pneg %p57
        $region74: #{tpu_custom_call.1} parent=71 // pred_check_branch
          %526 = sbr.rel (%p524) target = $region76
        $region75: #{tpu_custom_call.1} parent=71 // pred_region
          %527 = dma.done %s520, 128
        $region76: #{tpu_custom_call.1} parent=71 // pred_fallthru
          _
        // Predicated region
        $region77: #{tpu_custom_call.1} parent=71 // pred_check
          %p528 = pneg %p78
        $region78: #{tpu_custom_call.1} parent=71 // pred_check_branch
          %530 = sbr.rel (%p528) target = $region80
        $region79: #{tpu_custom_call.1} parent=71 // pred_region
          %531 = dma.done [#allocation7], 16
        $region80: #{tpu_custom_call.1} parent=71 // pred_fallthru
          _
        // Predicated region
        $region81: #{tpu_custom_call.1} parent=71 // pred_check
          %p532 = pneg %p99
        $region82: #{tpu_custom_call.1} parent=71 // pred_check_branch
          %534 = sbr.rel (%p532) target = $region84
        $region83: #{tpu_custom_call.1} parent=71 // pred_region
          %535 = dma.done [#allocation7], 16
        $region84: #{tpu_custom_call.1} parent=71 // pred_fallthru
          _
        // Predicated region
        $region85: #{tpu_custom_call.1} parent=71 // pred_check
          %p536 = pneg %p120
        $region86: #{tpu_custom_call.1} parent=71 // pred_check_branch
          %538 = sbr.rel (%p536) target = $region88
        $region87: #{tpu_custom_call.1} parent=71 // pred_region
          %539 = dma.done [#allocation10], 16
        $region88: #{tpu_custom_call.1} parent=71 // pred_fallthru
          _
        // Predicated region
        $region89: #{tpu_custom_call.1} parent=71 // pred_check
          %p540 = pneg %p141
        $region90: #{tpu_custom_call.1} parent=71 // pred_check_branch
          %542 = sbr.rel (%p540) target = $region92
        $region91: #{tpu_custom_call.1} parent=71 // pred_region
          %543 = dma.done [#allocation10], 16
        $region92: #{tpu_custom_call.1} parent=71 // pred_fallthru
          _
        // Predicated region
        $region93: #{tpu_custom_call.1} parent=71 // pred_check
          %p544 = pneg %p162
        $region94: #{tpu_custom_call.1} parent=71 // pred_check_branch
          %546 = sbr.rel (%p544) target = $region96
        $region95: #{tpu_custom_call.1} parent=71 // pred_region
          %547 = dma.done [#allocation13], 128
        $region96: #{tpu_custom_call.1} parent=71 // pred_fallthru
          _
        // Predicated region
        $region97: #{tpu_custom_call.1} parent=71 // pred_check
          %p548 = pneg %p183
        $region98: #{tpu_custom_call.1} parent=71 // pred_check_branch
          %550 = sbr.rel (%p548) target = $region100
        $region99: #{tpu_custom_call.1} parent=71 // pred_region
          %551 = dma.done [#allocation13], 256
        $region100: #{tpu_custom_call.1} parent=71 // pred_fallthru
          _
        // Predicated region
        $region101: #{tpu_custom_call.1} parent=71 // pred_check
          %p552 = pneg %p204
        $region102: #{tpu_custom_call.1} parent=71 // pred_check_branch
          %554 = sbr.rel (%p552) target = $region104
        $region103: #{tpu_custom_call.1} parent=71 // pred_region
          %555 = dma.done [#allocation16], 64
        $region104: #{tpu_custom_call.1} parent=71 // pred_fallthru
          _
        // Predicated region
        $region105: #{tpu_custom_call.1} parent=71 // pred_check
          %p556 = pneg %p225
        $region106: #{tpu_custom_call.1} parent=71 // pred_check_branch
          %558 = sbr.rel (%p556) target = $region108
        $region107: #{tpu_custom_call.1} parent=71 // pred_region
          %559 = dma.done [#allocation16], 128
        $region108: #{tpu_custom_call.1} parent=71 // pred_fallthru
          _
        // Predicated region
        $region109: #{tpu_custom_call.1} parent=71 // pred_check
          %p560 = pneg %p246
        $region110: #{tpu_custom_call.1} parent=71 // pred_check_branch
          %562 = sbr.rel (%p560) target = $region112
        $region111: #{tpu_custom_call.1} parent=71 // pred_region
          %563 = dma.done [#allocation19], 256
        $region112: #{tpu_custom_call.1} parent=71 // pred_fallthru
          _
        // Predicated region
        $region113: #{tpu_custom_call.1} parent=71 // pred_check
          %p564 = pneg %p267
        $region114: #{tpu_custom_call.1} parent=71 // pred_check_branch
          %566 = sbr.rel (%p564) target = $region116
        $region115: #{tpu_custom_call.1} parent=71 // pred_region
          %567 = dma.done [#allocation19], 16
        $region116: #{tpu_custom_call.1} parent=71 // pred_fallthru
          _
        // Predicated region
        $region117: #{tpu_custom_call.1} parent=71 // pred_check
          %p568 = pneg %p288
        $region118: #{tpu_custom_call.1} parent=71 // pred_check_branch
          %570 = sbr.rel (%p568) target = $region120
        $region119: #{tpu_custom_call.1} parent=71 // pred_region
          %571 = dma.done [#allocation22], 512
        $region120: #{tpu_custom_call.1} parent=71 // pred_fallthru
          _
        // Predicated region
        $region121: #{tpu_custom_call.1} parent=71 // pred_check
          %p572 = pneg %p309
        $region122: #{tpu_custom_call.1} parent=71 // pred_check_branch
          %574 = sbr.rel (%p572) target = $region124
        $region123: #{tpu_custom_call.1} parent=71 // pred_region
          %575 = dma.done [#allocation22], 16
        $region124: #{tpu_custom_call.1} parent=71 // pred_fallthru
          _
        %s576 = sand.u32 %s44, 1
        %s577 = scalar_lea.sflag [#allocation4], %s576
        %s578 = sand.u32 %s44, 1
        %s579 = smul.addr %s578, 8
        %s580 = scalar_lea.vmem [#allocation3], %s579
        %p581 = pneg %p57
        %p582 = pneg %p54
        %p583 = pneg %p78
        %p584 = pneg %p75
        %p585 = pneg %p99
        %p586 = pneg %p96
        %p587 = pneg %p120
        %p588 = pneg %p117
        %p589 = pneg %p141
        %p590 = pneg %p138
        %p591 = pneg %p162
        %p592 = pneg %p159
        %p593 = pneg %p183
        %p594 = pneg %p180
        %p595 = pneg %p204
        %p596 = pneg %p201
        %p597 = pneg %p225
        %p598 = pneg %p222
        %p599 = pneg %p246
        %p600 = pneg %p243
        %p601 = pneg %p267
        %p602 = pneg %p264
        %p603 = pneg %p288
        %p604 = pneg %p285
        %p605 = pneg %p309
        %p606 = pneg %p306
        %p607 = pneg %p335
        %p608 = pneg %p332
        %s609 = sand.u32 %s322, 1
        %s610 = scalar_lea.sflag [#allocation5], %s609
        %s611 = sand.u32 %s322, 1
        %s612 = smul.addr %s611, 8
        %s613 = scalar_lea.vmem [#allocation24], %s612
        %v615 = vld [vmem:[#allocation6] sm:$0x1]
        %v616 = vld [vmem:[#allocation8] sm:$0x1]
        %v617 = vld [vmem:[#allocation12] sm:$0xf]
        %v618 = vld [vmem:[#allocation12 + $0x4] sm:$0xf]
        %v619 = vld [vmem:[#allocation14] sm:$0xff]
        %v620 = vld [vmem:[#allocation14 + $0x8] sm:$0xff]
        %v621 = vld [vmem:[#allocation15] sm:$0xf]
        %v622 = vld [vmem:[#allocation17] sm:$0xff]
        %v623 = vld [vmem:[%s523] sm:$0xff]
        %vm624 = vcmask 261120
        %v625 = vsel %vm624, %v623, 0.0
        %626 = vadd.xlane.f32.xlu0 %v625
        %v627 = vpop.xlane.xlu0 %626
        %v628 = vrcp.pop 32.0
        %v629 = vmul.f32 %v627, %v628
        %v630 = vsub.f32 %v623, %v629
        %v631 = vmul.f32 %v630, %v630
        %v632 = vsel %vm624, %v631, 0.0
        %633 = vadd.xlane.f32.xlu0 %v632
        %v634 = vpop.xlane.xlu0 %633
        %v635 = vmul.f32 %v634, %v628
        %v636 = vadd.f32 %v635, 1e-05
        %v637 = vrsqrt.pop %v636
        %v638 = vmul.f32 %v630, %v637
        %v640 = vlaneseq
        %v641 = vshrl.u32 %v640, 7
        %v642 = vsub.s32 0, %v641
        %v643 = vrot.slane %v615, %v642
        %v645 = vmul.f32 %v638, %v643
        %v647 = vlaneseq
        %v648 = vshrl.u32 %v647, 7
        %v649 = vsub.s32 0, %v648
        %v650 = vrot.slane %v616, %v649
        %v652 = vadd.f32 %v645, %v650
        %v653 = vpack.c.bf16 %v652, %v652
        %655 = vset.pattern.permute.xlu0 0
        %656 = vperm.xlu0 %655, %v619
        %v657 = vpop.permute.xlu0 %656
        %660 = vset.pattern.permute.xlu0 0
        %661 = vperm.xlu0 %660, %v620
        %v662 = vpop.permute.xlu0 %661
        %v666 = vunpack.c.l.b16 %v617
        %v667 = vunpack.c.l.b16 %v618
        %v668 = vpack.c.b16 %v667, %v666
        %vm669 = vcmask 64512
        %v671 = vsel %vm669, %v668, 0
        %vm673 = vcmask 1043456
        %v675 = vsel %vm673, %v653, 0
        %677 = vmatprep.subr.bf16.mxu0 0
        %678 = vmatpush1.bf16.msra.mxu0 %v675
        %679 = vmatprep.subr.bf16.mxu0 0
        %680 = vmatpush1.bf16.msra.mxu0 0
        %681 = vmatprep.subr.bf16.mxu0 0
        %682 = vmatpush1.bf16.msra.mxu0 0
        %683 = vmatprep.subr.bf16.mxu0 0
        %684 = vmatpush1.bf16.msra.mxu0 0
        %685 = vmatprep.subr.bf16.mxu0 0
        %686 = vmatpush1.bf16.msra.mxu0 0
        %687 = vmatprep.subr.bf16.mxu0 0
        %688 = vmatpush1.bf16.msra.mxu0 0
        %689 = vmatprep.subr.bf16.mxu0 0
        %690 = vmatpush1.bf16.msra.mxu0 0
        %691 = vmatprep.subr.bf16.mxu0 0
        %692 = vmatpush1.bf16.msra.mxu0 0
        %693 = vmatprep.subr.bf16.mxu0 0
        %694 = vmatpush1.bf16.msra.mxu0 0
        %695 = vmatprep.subr.bf16.mxu0 0
        %696 = vmatpush1.bf16.msra.mxu0 0
        %697 = vmatprep.subr.bf16.mxu0 0
        %698 = vmatpush1.bf16.msra.mxu0 0
        %699 = vmatprep.subr.bf16.mxu0 0
        %700 = vmatpush1.bf16.msra.mxu0 0
        %701 = vmatprep.subr.bf16.mxu0 0
        %702 = vmatpush1.bf16.msra.mxu0 0
        %703 = vmatprep.subr.bf16.mxu0 0
        %704 = vmatpush1.bf16.msra.mxu0 0
        %705 = vmatprep.subr.bf16.mxu0 0
        %706 = vmatpush1.bf16.msra.mxu0 0
        %707 = vmatprep.subr.bf16.mxu0 0
        %708 = vmatpush1.bf16.msra.mxu0 0
        %709 = vmatprep.mubr.bf16.mxu0 0
        %710 = vmatmul.mubr.bf16.gmra.mrb[0].mxu0 %v671
        %v711 = vpop.f32.mrb[0].mxu0
        %v712 = vadd.f32 %v657, %v711
        %v713 = vpop.f32.mrb[0].mxu0
        %v714 = vpop.f32.mrb[0].mxu0
        %v715 = vadd.f32 %v662, %v714
        %v716 = vpop.f32.mrb[0].mxu0
        %717 = vdwg.mxu0
        %v718 = vmul.f32 %v712, 0.5
        %v719 = vmul.f32 %v715, 0.5
        %v720 = vmul.f32 %v712, 0.70710677
        %v721 = vmul.f32 %v715, 0.70710677
        %v722 = verf.f32.pop %v720
        %v723 = verf.f32.pop %v721
        %v724 = vadd.f32 %v722, 1.0
        %v725 = vadd.f32 %v723, 1.0
        %v726 = vmul.f32 %v718, %v724
        %v727 = vmul.f32 %v719, %v725
        %v728 = vpack.c.bf16 %v727, %v726
        %730 = vset.pattern.permute.xlu0 0
        %731 = vperm.xlu0 %730, %v622
        %v732 = vpop.permute.xlu0 %731
        %vm734 = vcmask 130048
        %v736 = vsel %vm734, %v621, 0
        %738 = vmatprep.subr.bf16.mxu0 0
        %739 = vmatpush1.bf16.msra.mxu0 %v728
        %740 = vmatprep.subr.bf16.mxu0 0
        %741 = vmatpush1.bf16.msra.mxu0 0
        %742 = vmatprep.subr.bf16.mxu0 0
        %743 = vmatpush1.bf16.msra.mxu0 0
        %744 = vmatprep.subr.bf16.mxu0 0
        %745 = vmatpush1.bf16.msra.mxu0 0
        %746 = vmatprep.subr.bf16.mxu0 0
        %747 = vmatpush1.bf16.msra.mxu0 0
        %748 = vmatprep.subr.bf16.mxu0 0
        %749 = vmatpush1.bf16.msra.mxu0 0
        %750 = vmatprep.subr.bf16.mxu0 0
        %751 = vmatpush1.bf16.msra.mxu0 0
        %752 = vmatprep.subr.bf16.mxu0 0
        %753 = vmatpush1.bf16.msra.mxu0 0
        %754 = vmatprep.subr.bf16.mxu0 0
        %755 = vmatpush1.bf16.msra.mxu0 0
        %756 = vmatprep.subr.bf16.mxu0 0
        %757 = vmatpush1.bf16.msra.mxu0 0
        %758 = vmatprep.subr.bf16.mxu0 0
        %759 = vmatpush1.bf16.msra.mxu0 0
        %760 = vmatprep.subr.bf16.mxu0 0
        %761 = vmatpush1.bf16.msra.mxu0 0
        %762 = vmatprep.subr.bf16.mxu0 0
        %763 = vmatpush1.bf16.msra.mxu0 0
        %764 = vmatprep.subr.bf16.mxu0 0
        %765 = vmatpush1.bf16.msra.mxu0 0
        %766 = vmatprep.subr.bf16.mxu0 0
        %767 = vmatpush1.bf16.msra.mxu0 0
        %768 = vmatprep.subr.bf16.mxu0 0
        %769 = vmatpush1.bf16.msra.mxu0 0
        %770 = vmatprep.mubr.bf16.mxu0 0
        %771 = vmatmul.mubr.bf16.gmra.mrb[0].mxu0 %v736
        %v772 = vpop.f32.mrb[0].mxu0
        %v773 = vadd.f32 %v732, %v772
        %v774 = vpop.f32.mrb[0].mxu0
        %v775 = vpop.f32.mrb[0].mxu0
        %v776 = vpop.f32.mrb[0].mxu0
        %777 = vdwg.mxu0
        %778 = vst.msk [vmem:[#allocation2] sm:$0xff] %vm624, %v773
        %v779 = vld [vmem:[%s523] sm:$0xff]
        %v780 = vld [vmem:[#allocation2] sm:$0xff]
        %v781 = vadd.f32 %v779, %v780
        %v782 = vld [vmem:[#allocation9] sm:$0x1]
        %v783 = vld [vmem:[#allocation11] sm:$0x1]
        %v784 = vsel %vm624, %v781, 0.0
        %785 = vadd.xlane.f32.xlu0 %v784
        %v786 = vpop.xlane.xlu0 %785
        %v787 = vmul.f32 %v786, %v628
        %v788 = vsub.f32 %v781, %v787
        %v789 = vmul.f32 %v788, %v788
        %v790 = vsel %vm624, %v789, 0.0
        %791 = vadd.xlane.f32.xlu0 %v790
        %v792 = vpop.xlane.xlu0 %791
        %v793 = vmul.f32 %v792, %v628
        %v794 = vadd.f32 %v793, 1e-05
        %v795 = vrsqrt.pop %v794
        %v796 = vmul.f32 %v788, %v795
        %v798 = vlaneseq
        %v799 = vshrl.u32 %v798, 7
        %v800 = vsub.s32 0, %v799
        %v801 = vrot.slane %v782, %v800
        %v803 = vmul.f32 %v796, %v801
        %v805 = vlaneseq
        %v806 = vshrl.u32 %v805, 7
        %v807 = vsub.s32 0, %v806
        %v808 = vrot.slane %v783, %v807
        %v810 = vadd.f32 %v803, %v808
        %v811 = vld [vmem:[#allocation18] sm:$0xf]
        %v812 = vld [vmem:[#allocation18 + $0x4] sm:$0xf]
        %v813 = vld [vmem:[#allocation18 + $0x8] sm:$0xf]
        %v814 = vld [vmem:[#allocation18 + $0xc] sm:$0xf]
        %v815 = vld [vmem:[#allocation21] sm:$0xf]
        %v816 = vld [vmem:[#allocation21 + $0x4] sm:$0xf]
        %v817 = vld [vmem:[#allocation21 + $0x8] sm:$0xf]
        %v818 = vld [vmem:[#allocation21 + $0xc] sm:$0xf]
        %v819 = vld [vmem:[#allocation21 + $0x10] sm:$0xf]
        %v820 = vld [vmem:[#allocation21 + $0x14] sm:$0xf]
        %v821 = vld [vmem:[#allocation21 + $0x18] sm:$0xf]
        %v822 = vld [vmem:[#allocation21 + $0x1c] sm:$0xf]
        %v823 = vpack.c.bf16 %v810, %v810
        %v824 = vld [vmem:[#allocation20] sm:$0x1]
        %v826 = vlaneseq
        %v827 = vshrl.u32 %v826, 7
        %v828 = vsub.s32 0, %v827
        %v829 = vrot.slane %v824, %v828
        %v835 = vunpack.c.l.b16 %v811
        %v836 = vunpack.c.l.b16 %v812
        %v837 = vunpack.c.l.b16 %v813
        %v838 = vunpack.c.l.b16 %v814
        %v839 = vpack.c.b16 %v836, %v835
        %v840 = vpack.c.b16 %v838, %v837
        %v844 = vsel %vm624, %v823, 0
        %846 = vmatprep.subr.bf16.mxu0 0
        %847 = vmatpush1.bf16.msra.mxu0 %v839
        %848 = vmatprep.subr.bf16.mxu0 0
        %849 = vmatpush1.bf16.msra.mxu0 %v840
        %850 = vmatprep.subr.bf16.mxu0 0
        %851 = vmatpush1.bf16.msra.mxu0 0
        %852 = vmatprep.subr.bf16.mxu0 0
        %853 = vmatpush1.bf16.msra.mxu0 0
        %854 = vmatprep.subr.bf16.mxu0 0
        %855 = vmatpush1.bf16.msra.mxu0 0
        %856 = vmatprep.subr.bf16.mxu0 0
        %857 = vmatpush1.bf16.msra.mxu0 0
        %858 = vmatprep.subr.bf16.mxu0 0
        %859 = vmatpush1.bf16.msra.mxu0 0
        %860 = vmatprep.subr.bf16.mxu0 0
        %861 = vmatpush1.bf16.msra.mxu0 0
        %862 = vmatprep.subr.bf16.mxu0 0
        %863 = vmatpush1.bf16.msra.mxu0 0
        %864 = vmatprep.subr.bf16.mxu0 0
        %865 = vmatpush1.bf16.msra.mxu0 0
        %866 = vmatprep.subr.bf16.mxu0 0
        %867 = vmatpush1.bf16.msra.mxu0 0
        %868 = vmatprep.subr.bf16.mxu0 0
        %869 = vmatpush1.bf16.msra.mxu0 0
        %870 = vmatprep.subr.bf16.mxu0 0
        %871 = vmatpush1.bf16.msra.mxu0 0
        %872 = vmatprep.subr.bf16.mxu0 0
        %873 = vmatpush1.bf16.msra.mxu0 0
        %874 = vmatprep.subr.bf16.mxu0 0
        %875 = vmatpush1.bf16.msra.mxu0 0
        %876 = vmatprep.subr.bf16.mxu0 0
        %877 = vmatpush1.bf16.msra.mxu0 0
        %878 = vmatprep.mubr.bf16.mxu0 0
        %879 = vmatmul.mubr.bf16.gmra.mrb[0].mxu0 %v844
        %v880 = vpop.f32.mrb[0].mxu0
        %v881 = vadd.f32 %v829, %v880
        %v882 = vpop.f32.mrb[0].mxu0
        %v883 = vpop.f32.mrb[0].mxu0
        %v884 = vpop.f32.mrb[0].mxu0
        %885 = vdwg.mxu0
        %v886 = vmul.f32 %v881, 0.5
        %v887 = vmul.f32 %v881, 0.70710677
        %v888 = verf.f32.pop %v887
        %v889 = vadd.f32 %v888, 1.0
        %v890 = vmul.f32 %v886, %v889
        %v891 = vpack.c.bf16 %v890, %v890
        %v892 = vld [vmem:[#allocation23] sm:$0x1]
        %v894 = vlaneseq
        %v895 = vshrl.u32 %v894, 7
        %v896 = vsub.s32 0, %v895
        %v897 = vrot.slane %v892, %v896
        %v907 = vunpack.c.l.b16 %v815
        %v908 = vunpack.c.l.b16 %v816
        %v909 = vunpack.c.l.b16 %v817
        %v910 = vunpack.c.l.b16 %v818
        %v911 = vunpack.c.l.b16 %v819
        %v912 = vunpack.c.l.b16 %v820
        %v913 = vunpack.c.l.b16 %v821
        %v914 = vunpack.c.l.b16 %v822
        %v915 = vpack.c.b16 %v908, %v907
        %v916 = vpack.c.b16 %v910, %v909
        %v917 = vpack.c.b16 %v912, %v911
        %v918 = vpack.c.b16 %v914, %v913
        %vm923 = vcmask 523264
        %v925 = vsel %vm923, %v891, 0
        %927 = vmatprep.subr.bf16.mxu0 0
        %928 = vmatpush1.bf16.msra.mxu0 %v915
        %929 = vmatprep.subr.bf16.mxu0 0
        %930 = vmatpush1.bf16.msra.mxu0 %v916
        %931 = vmatprep.subr.bf16.mxu0 0
        %932 = vmatpush1.bf16.msra.mxu0 %v917
        %933 = vmatprep.subr.bf16.mxu0 0
        %934 = vmatpush1.bf16.msra.mxu0 %v918
        %935 = vmatprep.subr.bf16.mxu0 0
        %936 = vmatpush1.bf16.msra.mxu0 0
        %937 = vmatprep.subr.bf16.mxu0 0
        %938 = vmatpush1.bf16.msra.mxu0 0
        %939 = vmatprep.subr.bf16.mxu0 0
        %940 = vmatpush1.bf16.msra.mxu0 0
        %941 = vmatprep.subr.bf16.mxu0 0
        %942 = vmatpush1.bf16.msra.mxu0 0
        %943 = vmatprep.subr.bf16.mxu0 0
        %944 = vmatpush1.bf16.msra.mxu0 0
        %945 = vmatprep.subr.bf16.mxu0 0
        %946 = vmatpush1.bf16.msra.mxu0 0
        %947 = vmatprep.subr.bf16.mxu0 0
        %948 = vmatpush1.bf16.msra.mxu0 0
        %949 = vmatprep.subr.bf16.mxu0 0
        %950 = vmatpush1.bf16.msra.mxu0 0
        %951 = vmatprep.subr.bf16.mxu0 0
        %952 = vmatpush1.bf16.msra.mxu0 0
        %953 = vmatprep.subr.bf16.mxu0 0
        %954 = vmatpush1.bf16.msra.mxu0 0
        %955 = vmatprep.subr.bf16.mxu0 0
        %956 = vmatpush1.bf16.msra.mxu0 0
        %957 = vmatprep.subr.bf16.mxu0 0
        %958 = vmatpush1.bf16.msra.mxu0 0
        %959 = vmatprep.mubr.bf16.mxu0 0
        %960 = vmatmul.mubr.bf16.gmra.mrb[0].mxu0 %v925
        %v961 = vpop.f32.mrb[0].mxu0
        %v962 = vadd.f32 %v897, %v961
        %v963 = vpop.f32.mrb[0].mxu0
        %v964 = vpop.f32.mrb[0].mxu0
        %v965 = vpop.f32.mrb[0].mxu0
        %966 = vdwg.mxu0
        %v967 = vadd.f32 %v781, %v962
        %968 = vst.msk [vmem:[%s613] sm:$0xff] %vm624, %v967
        %s969 = sand.u32 %s322, 1
        %s970 = scalar_lea.sflag [#allocation5], %s969
        %s971 = sand.u32 %s322, 1
        %s972 = smul.addr %s971, 8
        %s973 = scalar_lea.vmem [#allocation24], %s972
        // Predicated region
        $region125: #{tpu_custom_call.1} parent=71 // pred_check
          %p974 = pneg %p332
        $region126: #{tpu_custom_call.1} parent=71 // pred_check_branch
          %976 = sbr.rel (%p974) target = $region128
        $region127: #{tpu_custom_call.1} parent=71 // pred_region
          %s978 = ssub.s32 128, 128
          %979 = vsyncadd %s970, %s978
          %s980 = smul.addr %s36, 128
          %s981 = scalar_lea.hbm %s13, %s980
          %s983 = sshll.u32 %s973, 4
          %s984 = int_to_ptr.vmem [resolvable:$true] %s983
          %986 = dma.vmem_to_hbm [thread:$0]  %s984, 128, %s981, %s970
        $region128: #{tpu_custom_call.1} parent=71 // pred_fallthru
          _
      $region72: #{tpu_custom_call.1} parent=5 // pred_fallthru
        _
      %p987 = scmp.le.s32.totalorder 2, %s31
      // Predicated region
      $region129: #{tpu_custom_call.1} parent=5 // pred_check
        %p988 = pneg %p987
      $region130: #{tpu_custom_call.1} parent=5 // pred_check_branch
        %990 = sbr.rel (%p988) target = $region132
      $region131: #{tpu_custom_call.1} parent=5 // pred_region
        %s991 = ssub.s32 %s31, 2
        // Predicated region
        $region133: #{tpu_custom_call.1} parent=131 // pred_check
          %p992 = pneg %p338
        $region134: #{tpu_custom_call.1} parent=131 // pred_check_branch
          %994 = sbr.rel (%p992) target = $region136
        $region135: #{tpu_custom_call.1} parent=131 // pred_region
          %s995 = sand.u32 %s323, 1
          %s996 = scalar_lea.sflag [#allocation5], %s995
          %s997 = sand.u32 %s323, 1
          %s998 = smul.addr %s997, 8
          %s999 = scalar_lea.vmem [#allocation24], %s998
          %1000 = dma.done %s996, 128
        $region136: #{tpu_custom_call.1} parent=131 // pred_fallthru
          _
      $region132: #{tpu_custom_call.1} parent=5 // pred_fallthru
        _
    $region6: #{tpu_custom_call.1} parent=1 // loop_footer
      %s35 = sadd.s32 1, %s31
    $region7: #{tpu_custom_call.1} parent=1 // loop_footer_branch
      %30 = sbr.rel target = $region3
    $region8: #{tpu_custom_call.1} parent=1 // loop_exit
      _
    %1001 = vsyncpa [#allocation4], 1
    %s1002 = scalar_lea.sflag [#allocation4], 1
    %1003 = vsyncpa %s1002, 1
    %1004 = vsyncpa [#allocation7], 1
    %1005 = vsyncpa [#allocation10], 1
    %1006 = vsyncpa [#allocation13], 1
    %1007 = vsyncpa [#allocation16], 1
    %1008 = vsyncpa [#allocation19], 1
    %1009 = vsyncpa [#allocation22], 1
    %1010 = vsyncpa [#allocation5], 1
    %s1011 = scalar_lea.sflag [#allocation5], 1
    %1012 = vsyncpa %s1011, 1

</llo_original>
